<compile_context>
chip_gen: v5e
topology: v5e:2x2
jax: 0.10.0
libtpu: 0.0.40
codegen_flags: <defaults>
</compile_context>

<pallas_src>
import functools

import jax
import jax.numpy as jnp
from jax.experimental import pallas as pl
from jax.experimental.pallas import tpu as pltpu


def amsoftmax_kernel(xs_ref, w_ref, lb_ref, o_ref, *, s_m):
    # xs_ref: (tb, F)  bf16  -- rows already L2-normalized and scaled by s
    # w_ref : (F, tc)  param dtype (f32)
    # lb_ref: (tb, 1)  int32 class labels for this batch tile
    # o_ref : (tb, tc) f32 logits
    w = w_ref[...].astype(jnp.float32)

    # torch.norm(W, p=2, dim=0, keepdim=True).clamp(min=1e-9); W / norm
    # Column norms are independent per class tile, so tiling over C is exact.
    w_norm = jnp.sqrt(jnp.sum(w * w, axis=0, keepdims=True))
    w_norm = jnp.maximum(w_norm, 1e-9)
    wn = (w * pl.reciprocal(w_norm, approx=False)).astype(jnp.bfloat16)

    # MXU matmul on bf16 operands, f32 accumulation.  s is already folded into
    # xs, so this is s * cos_theta directly.
    costh_s = jnp.dot(xs_ref[...], wn, preferred_element_type=jnp.float32)

    # scatter_(1, lb, m): subtract s*m at the label column of each row.
    # Static Python branch -> no iota/compare/select emitted in eval mode.
    if s_m != 0.0:
        j = pl.program_id(1)                      # class-tile axis
        tc = o_ref.shape[1]
        class_idx = jax.lax.broadcasted_iota(jnp.int32, costh_s.shape, 1) + j * tc
        lb = lb_ref[...]                          # (tb, 1) broadcasts to (tb, tc)
        costh_s = jnp.where(class_idx == lb, costh_s - jnp.float32(s_m), costh_s)

    o_ref[...] = costh_s.astype(o_ref.dtype)


def amsoftmax_forward(x, W, lb, *, m=0.25, s=30.0, mode="train",
                      tile_c=256, tile_b=None, w_buffers=3):
    """x: (B, F), W: (F, C), lb: (B,) int32.  Returns (B, C) float32 logits."""
    B, F = x.shape
    F2, C = W.shape
    assert F == F2
    assert lb.shape[0] == B

    # --- tiling --------------------------------------------------------------
    if tile_b is None:
        tile_b = B if (B <= 256 or B % 256 != 0) else 256
    assert B % tile_b == 0
    assert tile_b == B or tile_b % 8 == 0
    tile_c = min(tile_c, C)
    # TODO(synk): ragged class counts (C % tile_c != 0) would need a masked
    # last tile; here we require an exact split.
    assert C % tile_c == 0
    assert tile_c % 128 == 0 or tile_c == C

    m_eff = 0.0 if mode == "eval" else float(m)
    s = float(s)

    # --- hoisted x normalization (done once, not per class tile) -------------
    # torch.norm(x, p=2, dim=1, keepdim=True).clamp(min=1e-9); x / norm,
    # with the output scale s folded in and a bf16 cast for the MXU feed.
    x32 = x.astype(jnp.float32)
    x_norm = jnp.maximum(jnp.sqrt(jnp.sum(x32 * x32, axis=1, keepdims=True)), 1e-9)
    xs = (x32 * (s / x_norm)).astype(jnp.bfloat16)

    lb_col = lb.astype(jnp.int32).reshape(B, 1)

    kernel = functools.partial(amsoftmax_kernel, s_m=s * m_eff)
    grid = (B // tile_b, C // tile_c)             # (batch tiles, class tiles)

    # --- VMEM budget: double-buffered xs/out/lb tiles + N-buffered W tiles ----
    w_bufs = 2 if w_buffers is None else max(int(w_buffers), 2)
    est = (2 * tile_b * F * xs.dtype.itemsize
           + w_bufs * F * tile_c * W.dtype.itemsize
           + 2 * tile_b * tile_c * 4
           + 2 * tile_b * 4)
    vmem_limit = int(min(max(2 * est + (8 << 20), 32 << 20), 64 << 20))

    x_spec = pl.BlockSpec((tile_b, F), lambda i, j: (i, 0))
    lb_spec = pl.BlockSpec((tile_b, 1), lambda i, j: (i, 0))
    out_spec = pl.BlockSpec((tile_b, tile_c), lambda i, j: (i, j))

    def _w_spec(nbuf):
        if nbuf is None or nbuf == 2:
            return pl.BlockSpec((F, tile_c), lambda i, j: (0, j))
        return pl.BlockSpec((F, tile_c), lambda i, j: (0, j),
                            pipeline_mode=pl.Buffered(nbuf))

    def _run(nbuf):
        return pl.pallas_call(
            kernel,
            out_shape=jax.ShapeDtypeStruct((B, C), jnp.float32),
            grid_spec=pltpu.PrefetchScalarGridSpec(
                num_scalar_prefetch=0,
                grid=grid,
                in_specs=[x_spec, _w_spec(nbuf), lb_spec],
                out_specs=out_spec),
            compiler_params=pltpu.CompilerParams(
                dimension_semantics=("parallel", "parallel"),
                vmem_limit_bytes=vmem_limit),
        )(xs, W, lb_col)

    if w_buffers is not None and w_buffers != 2:
        try:
            return _run(w_buffers)
        except Exception:
            # pl.Buffered multi-buffering not accepted by this jax build;
            # fall back to the default double-buffered pipeline.
            pass
    return _run(None)


# ------------------------------- references ----------------------------------

def _reference_f32(x, W, lb, m, s, mode):
    """Pure-f32 math, mirrors the PyTorch module exactly."""
    xn = x / jnp.maximum(jnp.linalg.norm(x, axis=1, keepdims=True), 1e-9)
    wn = W / jnp.maximum(jnp.linalg.norm(W, axis=0, keepdims=True), 1e-9)
    costh = xn @ wn
    if mode == "eval":
        return s * costh
    return s * (costh - m * jax.nn.one_hot(lb, W.shape[1], dtype=costh.dtype))


def _reference_bf16(x, W, lb, m, s, mode):
    """Mirrors the kernel's numerics (bf16 MXU operands, f32 accumulation)."""
    x32 = x.astype(jnp.float32)
    x_norm = jnp.maximum(jnp.sqrt(jnp.sum(x32 * x32, axis=1, keepdims=True)), 1e-9)
    xs = (x32 * (s / x_norm)).astype(jnp.bfloat16)
    w32 = W.astype(jnp.float32)
    w_norm = jnp.maximum(jnp.sqrt(jnp.sum(w32 * w32, axis=0, keepdims=True)), 1e-9)
    wn = (w32 * (1.0 / w_norm)).astype(jnp.bfloat16)
    costh_s = jnp.dot(xs, wn, preferred_element_type=jnp.float32)
    if mode == "eval":
        return costh_s
    return costh_s - (s * m) * jax.nn.one_hot(lb, W.shape[1], dtype=jnp.float32)


if __name__ == "__main__":
    # Small deterministic shapes consistent with the module's forward:
    # x: (batch, in_feats), W: (in_feats, n_classes), lb: (batch,)
    # C=512 with tile_c=256 -> 2 class tiles so the 2-D grid is exercised.
    B, F, C = 8, 32, 512
    m, s = 0.25, 30.0

    key = jax.random.PRNGKey(0)
    kx, kw, kl = jax.random.split(key, 3)

    x = jax.random.normal(kx, (B, F), dtype=jnp.float32)

    # nn.init.xavier_normal_(W, gain=1): std = sqrt(2 / (fan_in + fan_out))
    xavier_std = (2.0 / (F + C)) ** 0.5
    W = jax.random.normal(kw, (F, C), dtype=jnp.float32) * xavier_std

    lb = jax.random.randint(kl, (B,), 0, C, dtype=jnp.int32)

    out_train = amsoftmax_forward(x, W, lb, m=m, s=s, mode="train")
    out_eval = amsoftmax_forward(x, W, lb, m=m, s=s, mode="eval")
    jax.block_until_ready((out_train, out_eval))

    assert out_train.shape == (B, C) and out_eval.shape == (B, C)

    # Tight check against a reference that reproduces the kernel's bf16
    # operand quantization (same math, f32 accumulation).
    ref_train_bf16 = _reference_bf16(x, W, lb, m, s, "train")
    ref_eval_bf16 = _reference_bf16(x, W, lb, m, s, "eval")
    assert jnp.allclose(out_train, ref_train_bf16, rtol=1e-3, atol=2e-2)
    assert jnp.allclose(out_eval, ref_eval_bf16, rtol=1e-3, atol=2e-2)

    # Loose check against pure-f32 math: bf16 operand rounding bounds the
    # logit error by ~2 * s * 2^-8 * ||xn||*||wn|| ~= 0.23 (worst case).
    ref_train_f32 = _reference_f32(x, W, lb, m, s, "train")
    ref_eval_f32 = _reference_f32(x, W, lb, m, s, "eval")
    assert jnp.allclose(out_train, ref_train_f32, rtol=0.0, atol=0.25)
    assert jnp.allclose(out_eval, ref_eval_f32, rtol=0.0, atol=0.25)

    print("KERNEL_OK")
</pallas_src>

<mosaic_0001>
module attributes {stable_mosaic.version = 11 : i64} {
  func.func @amsoftmax_kernel(%arg0: i32, %arg1: i32, %arg2: memref<8x32xbf16, #tpu.memory_space<vmem>>, %arg3: memref<32x256xf32, #tpu.memory_space<vmem>>, %arg4: memref<8x1xi32, #tpu.memory_space<vmem>>, %arg5: memref<8x256xf32, #tpu.memory_space<vmem>>) attributes {dimension_semantics = [#tpu.dimension_semantics<parallel>, #tpu.dimension_semantics<parallel>], iteration_bounds = array<i64: 1, 2>, scalar_prefetch = 0 : i64, scratch_operands = 0 : i64, tpu.core_type = #tpu.core_type<tc>, window_params = [{transform_indices = @transform_0, window_bounds = array<i64: 8, 32>}, {transform_indices = @transform_1, window_bounds = array<i64: 32, 256>}, {transform_indices = @transform_2, window_bounds = array<i64: 8, 1>}, {transform_indices = @transform_3, window_bounds = array<i64: 8, 256>}]} {
    %c0 = arith.constant 0 : index
    %c0_0 = arith.constant 0 : index
    %0 = vector.load %arg3[%c0, %c0_0] : memref<32x256xf32, #tpu.memory_space<vmem>>, vector<32x256xf32>
    %1 = arith.mulf %0, %0 : vector<32x256xf32>
    %cst = arith.constant dense<0.000000e+00> : vector<256xf32>
    %2 = vector.multi_reduction <add>, %1, %cst [0] : vector<32x256xf32> to vector<256xf32>
    %3 = vector.shape_cast %2 : vector<256xf32> to vector<1x256xf32>
    %4 = math.sqrt %3 : vector<1x256xf32>
    %cst_1 = arith.constant 9.99999971E-10 : f32
    %5 = vector.broadcast %cst_1 : f32 to vector<1x256xf32>
    %6 = arith.maximumf %4, %5 : vector<1x256xf32>
    %7 = tpu.reciprocal %6 : vector<1x256xf32> -> vector<1x256xf32>
    %8 = vector.broadcast %7 : vector<1x256xf32> to vector<32x256xf32>
    %9 = arith.mulf %0, %8 : vector<32x256xf32>
    %10 = arith.truncf %9 : vector<32x256xf32> to vector<32x256xbf16>
    %c0_2 = arith.constant 0 : index
    %c0_3 = arith.constant 0 : index
    %11 = vector.load %arg2[%c0_2, %c0_3] : memref<8x32xbf16, #tpu.memory_space<vmem>>, vector<8x32xbf16>
    %cst_4 = arith.constant dense<0.000000e+00> : vector<8x256xf32>
    %12 = tpu.matmul %11, %10, %cst_4 {dimension_numbers = #tpu.dot_dimension_numbers<[1], [0], [0], [1], [0, 0, 1, 1], [], []>} : vector<8x32xbf16>, vector<32x256xbf16>, vector<8x256xf32> -> vector<8x256xf32>
    %13 = tpu.iota {dimensions = array<i32: 1>} : vector<8x256xi32>
    %c256_i32 = arith.constant 256 : i32
    %14 = arith.muli %arg1, %c256_i32 : i32
    %15 = vector.broadcast %14 : i32 to vector<8x256xi32>
    %16 = arith.addi %13, %15 : vector<8x256xi32>
    %c0_5 = arith.constant 0 : index
    %c0_6 = arith.constant 0 : index
    %17 = vector.load %arg4[%c0_5, %c0_6] : memref<8x1xi32, #tpu.memory_space<vmem>>, vector<8x1xi32>
    %18 = vector.broadcast %17 : vector<8x1xi32> to vector<8x256xi32>
    %19 = arith.cmpi eq, %16, %18 : vector<8x256xi32>
    %cst_7 = arith.constant 7.500000e+00 : f32
    %20 = vector.broadcast %cst_7 : f32 to vector<8x256xf32>
    %21 = arith.subf %12, %20 : vector<8x256xf32>
    %22 = arith.select %19, %21, %12 : vector<8x256xi1>, vector<8x256xf32>
    %c0_8 = arith.constant 0 : index
    %c0_9 = arith.constant 0 : index
    %23 = vector.load %arg5[%c0_8, %c0_9] : memref<8x256xf32, #tpu.memory_space<vmem>>, vector<8x256xf32>
    tpu.vector_store %arg5[%c0_8, %c0_9], %22 {strides = array<i32>} : memref<8x256xf32, #tpu.memory_space<vmem>>, vector<8x256xf32>,
    return
  }
  func.func @transform_0(%arg0: i32, %arg1: i32) -> (i32, i32) {
    %c0_i32 = arith.constant 0 : i32
    %c0_i32_0 = arith.constant 0 : i32
    return %arg0, %c0_i32 : i32, i32
  }
  func.func @transform_1(%arg0: i32, %arg1: i32) -> (i32, i32) {
    %c0_i32 = arith.constant 0 : i32
    %c0_i32_0 = arith.constant 0 : i32
    return %c0_i32, %arg1 : i32, i32
  }
  func.func @transform_2(%arg0: i32, %arg1: i32) -> (i32, i32) {
    %c0_i32 = arith.constant 0 : i32
    %c0_i32_0 = arith.constant 0 : i32
    return %arg0, %c0_i32 : i32, i32
  }
  func.func @transform_3(%arg0: i32, %arg1: i32) -> (i32, i32) {
    %c0_i32 = arith.constant 0 : i32
    return %arg0, %arg1 : i32, i32
  }
}

</mosaic_0001>

<llo_original>
// kernel: tpu_custom_call.1
$region0: #{tpu_custom_call.1}
  #allocation0 [shape = 'u32[]', space=smem, size = 0x4, offset = 0x4, fixed_abs, tag = 'smem constant byte address 0x4 - core index']
  #allocation1 [shape = 'u32[72,128]{1,0:T(1,128)}', space=vmem, size = 0x9000, scoped, tag = 'internal scratch']
  %s0 = inlined_call_operand.vmem [shape: bf16[8,32], index: 0, kind: input, shape index: {}]
  %s1 = inlined_call_operand.hbm [shape: f32[32,512], index: 1, kind: input, shape index: {}]
  %s2 = inlined_call_operand.vmem [shape: s32[8,1], index: 2, kind: input, shape index: {}]
  %s3 = inlined_call_operand.hbm [shape: f32[8,512], index: 3, kind: output, shape index: {}]
  %s4 = sld [smem:[#allocation0]]
  $region49: #{tpu_custom_call.1} parent=0
    _
  %s6 = ssub.s32 1, %s4
  %s7 = scalar_select 0, %s6, %s4
  $region1: #{tpu_custom_call.1} parent=0
    #allocation2 [shape = 'u8[65536]{0}', space=vmem, size = 0x10000, scoped, tag = 'input window, operand 1']
    #allocation3 [shape = 's32[2]{0}', space=sflag, size = 0x8, scoped, tag = 'scoped memory for tpu_custom_call.1']
    #allocation4 [shape = 's32[2]{0}', space=sflag, size = 0x8, scoped, tag = 'scoped memory for tpu_custom_call.1']
    #allocation5 [shape = 'u8[16384]{0}', space=vmem, size = 0x4000, scoped, tag = 'output window, operand 0']
    %8 = vsyncpa [#allocation3], 0
    %s9 = scalar_lea.sflag [#allocation3], 1
    %10 = vsyncpa %s9, 0
    %11 = vsyncpa [#allocation4], 0
    %s12 = scalar_lea.sflag [#allocation4], 1
    %13 = vsyncpa %s12, 0
    loop: start=0, step=1, limit=4
    $region2: #{tpu_custom_call.1} parent=1 // loop_pre_header
      _
    $region3: #{tpu_custom_call.1} parent=1 // loop_header
      %s15 = sphi 0, %s19
      %p16 = scmp.ge.s32.totalorder %s15, 4
      %s22 = sphi 0, %s34
      %s23 = sphi 0, %s30
      %s24 = sphi 0, %s22
      %s25 = sphi 0, %s23
      %s26 = sphi 0, %s24
      %s27 = sphi 0, %s25
      %s37 = sphi 0, %s39
      %s40 = sphi 0, %s37
      %s41 = sphi 0, %s40
      %s57 = sphi 0, %s41
      %s63 = sphi 0, %s65
      %s66 = sphi 0, %s63
      %s67 = sphi 0, %s66
      %s83 = sphi 0, %s67
      %s89 = sphi 0, %s91
      %s92 = sphi 0, %s89
      %s93 = sphi 0, %s92
      %s109 = sphi 0, %s93
      %s117 = sphi 0, %s119
      %s120 = sphi 0, %s117
      %s121 = sphi 0, %s120
      %s137 = sphi 0, %s121
    $region4: #{tpu_custom_call.1} parent=1 // loop_header_branch
      %18 = sbr.rel (%p16) target = $region8
    $region5: #{tpu_custom_call.1} parent=1 // loop_body
      %s20 = ssub.s32 %s15, 1
      %s21 = ssub.s32 %s15, 2
      %s28 = sadd.s32 1, %s23
      %p29 = scmp.ge.s32.totalorder %s28, 2
      %s30 = scalar_select %p29, 0, %s28
      %s31 = sadd.s32 1, %s22
      %s32 = scalar_select %p29, %s31, %s22
      %p33 = scmp.ge.s32.totalorder %s32, 1
      %s34 = scalar_select %p33, 0, %s32
      %s35 = ssub.s32 %s22, %s34
      %p36 = scmp.eq.s32.totalorder %s35, 0
      %s38 = sadd.s32 %s37, 1
      %s39 = scalar_select %p36, %s37, %s38
      %p42 = pneg %p36
      %p43 = scmp.eq.s32.totalorder %s15, 1
      %p44 = por %p42, %p43
      %p45 = scmp.ne.s32.totalorder %s37, %s40
      %p46 = scmp.eq.s32.totalorder %s15, 0
      %p47 = por %p45, %p46
      %p48 = scmp.ne.s32.totalorder %s37, %s40
      %p49 = scmp.eq.s32.totalorder %s20, 1
      %p50 = por %p48, %p49
      %p51 = scmp.ne.s32.totalorder %s40, %s41
      %p52 = scmp.eq.s32.totalorder %s20, 0
      %p53 = por %p51, %p52
      %p54 = scmp.ne.s32.totalorder %s40, %s41
      %p55 = scmp.eq.s32.totalorder %s21, 1
      %p56 = por %p54, %p55
      %p58 = scmp.ne.s32.totalorder %s41, %s57
      %p59 = scmp.eq.s32.totalorder %s21, 0
      %p60 = por %p58, %p59
      %s61 = ssub.s32 %s23, %s30
      %p62 = scmp.eq.s32.totalorder %s61, 0
      %s64 = sadd.s32 %s63, 1
      %s65 = scalar_select %p62, %s63, %s64
      %p68 = pneg %p62
      %p69 = scmp.eq.s32.totalorder %s15, 1
      %p70 = por %p68, %p69
      %p71 = scmp.ne.s32.totalorder %s63, %s66
      %p72 = scmp.eq.s32.totalorder %s15, 0
      %p73 = por %p71, %p72
      %p74 = scmp.ne.s32.totalorder %s63, %s66
      %p75 = scmp.eq.s32.totalorder %s20, 1
      %p76 = por %p74, %p75
      %p77 = scmp.ne.s32.totalorder %s66, %s67
      %p78 = scmp.eq.s32.totalorder %s20, 0
      %p79 = por %p77, %p78
      %p80 = scmp.ne.s32.totalorder %s66, %s67
      %p81 = scmp.eq.s32.totalorder %s21, 1
      %p82 = por %p80, %p81
      %p84 = scmp.ne.s32.totalorder %s67, %s83
      %p85 = scmp.eq.s32.totalorder %s21, 0
      %p86 = por %p84, %p85
      %s87 = ssub.s32 %s22, %s34
      %p88 = scmp.eq.s32.totalorder %s87, 0
      %s90 = sadd.s32 %s89, 1
      %s91 = scalar_select %p88, %s89, %s90
      %p94 = pneg %p88
      %p95 = scmp.eq.s32.totalorder %s15, 1
      %p96 = por %p94, %p95
      %p97 = scmp.ne.s32.totalorder %s89, %s92
      %p98 = scmp.eq.s32.totalorder %s15, 0
      %p99 = por %p97, %p98
      %p100 = scmp.ne.s32.totalorder %s89, %s92
      %p101 = scmp.eq.s32.totalorder %s20, 1
      %p102 = por %p100, %p101
      %p103 = scmp.ne.s32.totalorder %s92, %s93
      %p104 = scmp.eq.s32.totalorder %s20, 0
      %p105 = por %p103, %p104
      %p106 = scmp.ne.s32.totalorder %s92, %s93
      %p107 = scmp.eq.s32.totalorder %s21, 1
      %p108 = por %p106, %p107
      %p110 = scmp.ne.s32.totalorder %s93, %s109
      %p111 = scmp.eq.s32.totalorder %s21, 0
      %p112 = por %p110, %p111
      %s113 = ssub.s32 %s22, %s34
      %s114 = ssub.s32 %s23, %s30
      %s115 = sor.u32 %s113, %s114
      %p116 = scmp.eq.s32.totalorder %s115, 0
      %s118 = sadd.s32 %s117, 1
      %s119 = scalar_select %p116, %s117, %s118
      %p122 = pneg %p116
      %p123 = scmp.eq.s32.totalorder %s15, 1
      %p124 = por %p122, %p123
      %p125 = scmp.ne.s32.totalorder %s117, %s120
      %p126 = scmp.eq.s32.totalorder %s15, 0
      %p127 = por %p125, %p126
      %p128 = scmp.ne.s32.totalorder %s117, %s120
      %p129 = scmp.eq.s32.totalorder %s20, 1
      %p130 = por %p128, %p129
      %p131 = scmp.ne.s32.totalorder %s120, %s121
      %p132 = scmp.eq.s32.totalorder %s20, 0
      %p133 = por %p131, %p132
      %p134 = scmp.ne.s32.totalorder %s120, %s121
      %p135 = scmp.eq.s32.totalorder %s21, 1
      %p136 = por %p134, %p135
      %p138 = scmp.ne.s32.totalorder %s121, %s137
      %p139 = scmp.eq.s32.totalorder %s21, 0
      %p140 = por %p138, %p139
      %p141 = scmp.le.s32.totalorder 1, %s15
      %p142 = scmp.lt.s32.totalorder %s15, 3
      %p143 = pnand %p141, %p142
      %p144 = pneg %p143
      // Predicated region
      $region9: #{tpu_custom_call.1} parent=5 // pred_check
        _
      $region10: #{tpu_custom_call.1} parent=5 // pred_check_branch
        %146 = sbr.rel (%p143) target = $region12
      $region11: #{tpu_custom_call.1} parent=5 // pred_region
        %s147 = ssub.s32 %s15, 1
        // Predicated region
        $region13: #{tpu_custom_call.1} parent=11 // pred_check
          %p148 = pneg %p53
        $region14: #{tpu_custom_call.1} parent=11 // pred_check_branch
          %150 = sbr.rel (%p148) target = $region16
        $region15: #{tpu_custom_call.1} parent=11 // pred_region
          %p151 = scmp.lt.s32.totalorder %s24, 0
          %s152 = scalar_select %p151, %s24, 0
          %s153 = smul.addr %s152, 4
          %s154 = scalar_lea.vmem %s0, %s153
        $region16: #{tpu_custom_call.1} parent=11 // pred_fallthru
          _
        // Predicated region
        $region17: #{tpu_custom_call.1} parent=11 // pred_check
          %p155 = pneg %p105
        $region18: #{tpu_custom_call.1} parent=11 // pred_check_branch
          %157 = sbr.rel (%p155) target = $region20
        $region19: #{tpu_custom_call.1} parent=11 // pred_region
          %p158 = scmp.lt.s32.totalorder %s24, 0
          %s159 = scalar_select %p158, %s24, 0
          %s160 = smul.addr %s159, 8
          %s161 = scalar_lea.vmem %s2, %s160
        $region20: #{tpu_custom_call.1} parent=11 // pred_fallthru
          _
      $region12: #{tpu_custom_call.1} parent=5 // pred_fallthru
        _
      %p162 = scmp.lt.s32.totalorder %s15, 2
      // Predicated region
      $region21: #{tpu_custom_call.1} parent=5 // pred_check
        %p163 = pneg %p162
      $region22: #{tpu_custom_call.1} parent=5 // pred_check_branch
        %165 = sbr.rel (%p163) target = $region24
      $region23: #{tpu_custom_call.1} parent=5 // pred_region
        // Predicated region
        $region25: #{tpu_custom_call.1} parent=23 // pred_check
          %p166 = pneg %p73
        $region26: #{tpu_custom_call.1} parent=23 // pred_check_branch
          %168 = sbr.rel (%p166) target = $region28
        $region27: #{tpu_custom_call.1} parent=23 // pred_region
          %s169 = sand.u32 %s63, 1
          %s170 = scalar_lea.sflag [#allocation3], %s169
          %s171 = sand.u32 %s63, 1
          %s172 = smul.addr %s171, 64
          %s173 = scalar_lea.vmem [#allocation2], %s172
          %s174 = smul.u32 2, %s23
          %176 = vsyncadd %s170, 0
          %s177 = smul.addr %s174, 8
          %s178 = scalar_lea.hbm %s1, %s177
          %s179 = sshll.u32 %s178, 4
          %s180 = int_to_ptr.hbm [resolvable:$true] %s179
          %s181 = sshll.u32 %s173, 4
          %s182 = int_to_ptr.vmem [resolvable:$true] %s181
          %187 = dma.hbm_to_vmem [thread:$0]  %s180, 1024, %s182, %s170, 512, 256, 16
        $region28: #{tpu_custom_call.1} parent=23 // pred_fallthru
          _
      $region24: #{tpu_custom_call.1} parent=5 // pred_fallthru
        _
      %p188 = scmp.le.s32.totalorder 1, %s15
      %p189 = scmp.lt.s32.totalorder %s15, 3
      %p190 = pnand %p188, %p189
      %p191 = pneg %p190
      // Predicated region
      $region29: #{tpu_custom_call.1} parent=5 // pred_check
        _
      $region30: #{tpu_custom_call.1} parent=5 // pred_check_branch
        %193 = sbr.rel (%p190) target = $region32
      $region31: #{tpu_custom_call.1} parent=5 // pred_region
        %s194 = ssub.s32 %s15, 1
        %s195 = sand.u32 %s66, 1
        %s196 = scalar_lea.sflag [#allocation3], %s195
        %s197 = sand.u32 %s66, 1
        %s198 = smul.addr %s197, 64
        %s199 = scalar_lea.vmem [#allocation2], %s198
        // Predicated region
        $region33: #{tpu_custom_call.1} parent=31 // pred_check
          %p200 = pneg %p79
        $region34: #{tpu_custom_call.1} parent=31 // pred_check_branch
          %202 = sbr.rel (%p200) target = $region36
        $region35: #{tpu_custom_call.1} parent=31 // pred_region
          %204 = dma.done %s196, 1024
        $region36: #{tpu_custom_call.1} parent=31 // pred_fallthru
          _
        %p205 = scmp.lt.s32.totalorder %s24, 0
        %s206 = scalar_select %p205, %s24, 0
        %s207 = smul.addr %s206, 4
        %s208 = scalar_lea.vmem %s0, %s207
        %p209 = pneg %p53
        %p210 = pneg %p50
        %s211 = sand.u32 %s66, 1
        %s212 = scalar_lea.sflag [#allocation3], %s211
        %s213 = sand.u32 %s66, 1
        %s214 = smul.addr %s213, 64
        %s215 = scalar_lea.vmem [#allocation2], %s214
        %p216 = pneg %p79
        %p217 = pneg %p76
        %p218 = scmp.lt.s32.totalorder %s24, 0
        %s219 = scalar_select %p218, %s24, 0
        %s220 = smul.addr %s219, 8
        %s221 = scalar_lea.vmem %s2, %s220
        %p222 = pneg %p105
        %p223 = pneg %p102
        %p224 = pneg %p133
        %p225 = pneg %p130
        %s226 = sand.u32 %s120, 1
        %s227 = scalar_lea.sflag [#allocation4], %s226
        %s228 = sand.u32 %s120, 1
        %s229 = smul.addr %s228, 16
        %s230 = scalar_lea.vmem [#allocation5], %s229
        %p231 = scmp.lt.s32.totalorder %s24, 0
        %s232 = scalar_select %p231, %s24, 0
        %s233 = smul.addr %s232, 4
        %s234 = scalar_lea.vmem %s0, %s233
        %s235 = smul.u32 2, %s25
        %p236 = scmp.lt.s32.totalorder %s24, 0
        %s237 = scalar_select %p236, %s24, 0
        %s238 = smul.addr %s237, 8
        %s239 = scalar_lea.vmem %s2, %s238
        %s240 = smul.u32 2, %s25
        %v242 = vld [vmem:[%s199] sm:$0xff]
        %v243 = vld [vmem:[%s199 + $0x8] sm:$0xff]
        %v244 = vld [vmem:[%s199 + $0x10] sm:$0xff]
        %v245 = vld [vmem:[%s199 + $0x18] sm:$0xff]
        %v246 = vld [vmem:[%s199 + $0x20] sm:$0xff]
        %v247 = vld [vmem:[%s199 + $0x28] sm:$0xff]
        %v248 = vld [vmem:[%s199 + $0x30] sm:$0xff]
        %v249 = vld [vmem:[%s199 + $0x38] sm:$0xff]
        %v250 = vmul.f32 %v242, %v242
        %v251 = vmul.f32 %v243, %v243
        %v252 = vmul.f32 %v244, %v244
        %v253 = vmul.f32 %v245, %v245
        %v254 = vmul.f32 %v246, %v246
        %v255 = vmul.f32 %v247, %v247
        %v256 = vmul.f32 %v248, %v248
        %v257 = vmul.f32 %v249, %v249
        %v258 = vadd.f32 %v250, %v252
        %v259 = vadd.f32 %v258, %v254
        %v260 = vadd.f32 %v259, %v256
        %v261 = vrot.slane %v260, 4
        %v262 = vadd.f32 %v260, %v261
        %v263 = vrot.slane %v262, 2
        %v264 = vadd.f32 %v262, %v263
        %v265 = vrot.slane %v264, 1
        %v266 = vadd.f32 %v264, %v265
        %v267 = vadd.f32 %v251, %v253
        %v268 = vadd.f32 %v267, %v255
        %v269 = vadd.f32 %v268, %v257
        %v270 = vrot.slane %v269, 4
        %v271 = vadd.f32 %v269, %v270
        %v272 = vrot.slane %v271, 2
        %v273 = vadd.f32 %v271, %v272
        %v274 = vrot.slane %v273, 1
        %v275 = vadd.f32 %v273, %v274
        %v276 = vrsqrt.pop %v266
        %v277 = vmul.f32 %v276, %v266
        %v278 = vmul.f32 %v277, %v276
        %v279 = vmul.f32 0.5, %v278
        %v280 = vsub.f32 1.5, %v279
        %v281 = vmul.f32 %v276, %v280
        %v282 = vmul.f32 %v266, %v281
        %vm283 = vcmp.eq.f32.partialorder %v266, inf
        %v284 = vsel %vm283, %v266, %v282
        %vm285 = vcmp.eq.f32.partialorder %v266, 0.0
        %v286 = vand.u32 %v266, 2147483648
        %v287 = vsel %vm285, %v286, %v284
        %v288 = vrsqrt.pop %v275
        %v289 = vmul.f32 %v288, %v275
        %v290 = vmul.f32 %v289, %v288
        %v291 = vmul.f32 0.5, %v290
        %v292 = vsub.f32 1.5, %v291
        %v293 = vmul.f32 %v288, %v292
        %v294 = vmul.f32 %v275, %v293
        %vm295 = vcmp.eq.f32.partialorder %v275, inf
        %v296 = vsel %vm295, %v275, %v294
        %vm297 = vcmp.eq.f32.partialorder %v275, 0.0
        %v298 = vand.u32 %v275, 2147483648
        %v299 = vsel %vm297, %v298, %v296
        %v300 = vmax.f32 %v287, 1e-09
        %v301 = vmax.f32 %v299, 1e-09
        %v302 = vrcp.pop %v300
        %v303 = vmul.f32 %v300, %v302
        %v304 = vsub.f32 1.0, %v303
        %v305 = vmul.f32 %v302, %v304
        %v306 = vadd.f32 %v302, %v305
        %vm307 = vweird.f32 %v300
        %vm308 = vweird.f32 %v302
        %vm309 = vmor %vm307, %vm308
        %v310 = vsel %vm309, %v302, %v306
        %v311 = vand.u32 2147483647, %v300
        %vm312 = vcmp.eq.f32.partialorder %v311, 8.507059e+37
        %v313 = vand.u32 %v300, 2147483648
        %v314 = vor.u32 1.1754944e-38, %v313
        %v315 = vsel %vm312, %v314, %v310
        %v316 = vrcp.pop %v301
        %v317 = vmul.f32 %v301, %v316
        %v318 = vsub.f32 1.0, %v317
        %v319 = vmul.f32 %v316, %v318
        %v320 = vadd.f32 %v316, %v319
        %vm321 = vweird.f32 %v301
        %vm322 = vweird.f32 %v316
        %vm323 = vmor %vm321, %vm322
        %v324 = vsel %vm323, %v316, %v320
        %v325 = vand.u32 2147483647, %v301
        %vm326 = vcmp.eq.f32.partialorder %v325, 8.507059e+37
        %v327 = vand.u32 %v301, 2147483648
        %v328 = vor.u32 1.1754944e-38, %v327
        %v329 = vsel %vm326, %v328, %v324
        %v330 = vmul.f32 %v242, %v315
        %v331 = vmul.f32 %v243, %v329
        %v332 = vmul.f32 %v244, %v315
        %v333 = vmul.f32 %v245, %v329
        %v334 = vmul.f32 %v246, %v315
        %v335 = vmul.f32 %v247, %v329
        %v336 = vmul.f32 %v248, %v315
        %v337 = vmul.f32 %v249, %v329
        %v338 = vpack.c.bf16 %v332, %v330
        %v339 = vpack.c.bf16 %v333, %v331
        %v340 = vpack.c.bf16 %v336, %v334
        %v341 = vpack.c.bf16 %v337, %v335
        %v342 = vld [vmem:[%s234] sm:$0xf]
        %vm343 = vcmask 261120
        %v345 = vsel %vm343, %v342, 0
        %347 = vmatpush.bf16.msra.mxu0 0
        %348 = vmatpush.bf16.msra.mxu0 0
        %349 = vmatpush.bf16.msra.mxu0 0
        %350 = vmatpush.bf16.msra.mxu0 0
        %351 = vmatpush.bf16.msra.mxu0 0
        %352 = vmatpush.bf16.msra.mxu0 0
        %353 = vmatpush.bf16.msra.mxu0 %v340
        %354 = vmatpush.bf16.msra.mxu0 %v338
        %355 = vmatmul.bf16.gmra.mxu0 %v345
        %v356 = vpop.f32.mrf.mxu0
        %v357 = vadd.f32 0.0, %v356
        %v358 = vpop.f32.mrf.mxu0
        %359 = vdwg.mxu0
        %360 = vmatpush.bf16.msra.mxu0 0
        %361 = vmatpush.bf16.msra.mxu0 0
        %362 = vmatpush.bf16.msra.mxu0 0
        %363 = vmatpush.bf16.msra.mxu0 0
        %364 = vmatpush.bf16.msra.mxu0 0
        %365 = vmatpush.bf16.msra.mxu0 0
        %366 = vmatpush.bf16.msra.mxu0 %v341
        %367 = vmatpush.bf16.msra.mxu0 %v339
        %368 = vmatmul.bf16.gmra.mxu0 %v345
        %v369 = vpop.f32.mrf.mxu0
        %v370 = vadd.f32 0.0, %v369
        %v371 = vpop.f32.mrf.mxu0
        %372 = vdwg.mxu0
        %v373 = vlaneseq
        %v374 = vand.u32 %v373, 127
        %v375 = vadd.s32 %v374, 128
        %s376 = smul.u32 %s25, 256
        %v377 = vstv %s376
        %v378 = vadd.s32 %v374, %v377
        %v379 = vadd.s32 %v375, %v377
        %v380 = vld [vmem:[%s239] sm:$0xff]
        %381 = vset.pattern.permute.xlu0 0
        %382 = vperm.xlu0 %381, %v380
        %v383 = vpop.permute.xlu0 %382
        %vm384 = vcmp.eq.s32.totalorder %v378, %v383
        %vm385 = vcmp.eq.s32.totalorder %v379, %v383
        %v386 = vsub.f32 %v357, 7.5
        %v387 = vsub.f32 %v370, 7.5
        %v388 = vsel %vm384, %v386, %v357
        %v389 = vsel %vm385, %v387, %v370
        %390 = vst [vmem:[%s230] sm:$0xff] %v388
        %391 = vst [vmem:[%s230 + $0x8] sm:$0xff] %v389
        %s392 = sand.u32 %s120, 1
        %s393 = scalar_lea.sflag [#allocation4], %s392
        %s394 = sand.u32 %s120, 1
        %s395 = smul.addr %s394, 16
        %s396 = scalar_lea.vmem [#allocation5], %s395
        // Predicated region
        $region37: #{tpu_custom_call.1} parent=31 // pred_check
          %p397 = pneg %p130
        $region38: #{tpu_custom_call.1} parent=31 // pred_check_branch
          %399 = sbr.rel (%p397) target = $region40
        $region39: #{tpu_custom_call.1} parent=31 // pred_region
          %s400 = smul.u32 2, %s25
          %402 = vsyncadd %s393, 0
          %s403 = smul.addr %s24, 4
          %s404 = sadd.s32 %s400, %s403
          %s405 = smul.addr %s404, 8
          %s406 = scalar_lea.hbm %s3, %s405
          %s408 = sshll.u32 %s396, 4
          %s409 = int_to_ptr.vmem [resolvable:$true] %s408
          %s410 = sshll.u32 %s406, 4
          %s411 = int_to_ptr.hbm [resolvable:$true] %s410
          %413 = dma.vmem_to_hbm [thread:$0]  %s409, 256, %s411, %s393
        $region40: #{tpu_custom_call.1} parent=31 // pred_fallthru
          _
      $region32: #{tpu_custom_call.1} parent=5 // pred_fallthru
        _
      %p414 = scmp.le.s32.totalorder 2, %s15
      // Predicated region
      $region41: #{tpu_custom_call.1} parent=5 // pred_check
        %p415 = pneg %p414
      $region42: #{tpu_custom_call.1} parent=5 // pred_check_branch
        %417 = sbr.rel (%p415) target = $region44
      $region43: #{tpu_custom_call.1} parent=5 // pred_region
        %s418 = ssub.s32 %s15, 2
        // Predicated region
        $region45: #{tpu_custom_call.1} parent=43 // pred_check
          %p419 = pneg %p136
        $region46: #{tpu_custom_call.1} parent=43 // pred_check_branch
          %421 = sbr.rel (%p419) target = $region48
        $region47: #{tpu_custom_call.1} parent=43 // pred_region
          %s422 = sand.u32 %s121, 1
          %s423 = scalar_lea.sflag [#allocation4], %s422
          %s424 = sand.u32 %s121, 1
          %s425 = smul.addr %s424, 16
          %s426 = scalar_lea.vmem [#allocation5], %s425
          %428 = dma.done %s423, 256
        $region48: #{tpu_custom_call.1} parent=43 // pred_fallthru
          _
      $region44: #{tpu_custom_call.1} parent=5 // pred_fallthru
        _
    $region6: #{tpu_custom_call.1} parent=1 // loop_footer
      %s19 = sadd.s32 1, %s15
    $region7: #{tpu_custom_call.1} parent=1 // loop_footer_branch
      %14 = sbr.rel target = $region3
    $region8: #{tpu_custom_call.1} parent=1 // loop_exit
      _
    %429 = vsyncpa [#allocation3], 1
    %s430 = scalar_lea.sflag [#allocation3], 1
    %431 = vsyncpa %s430, 1
    %432 = vsyncpa [#allocation4], 1
    %s433 = scalar_lea.sflag [#allocation4], 1
    %434 = vsyncpa %s433, 1

</llo_original>
